<compile_context>
chip_gen: v7x
topology: tpu7x:2x2x1
jax: 0.10.0
libtpu: 0.0.40
codegen_flags: <defaults>
</compile_context>

<pallas_src>
import functools

import jax
import jax.numpy as jnp
from jax.experimental import pallas as pl
from jax.experimental.pallas import tpu as pltpu


def policy_kernel(state_ref, w1_ref, b1_ref, w2_ref, b2_ref, out_ref):
    # embedding_l: Linear + ReLU, all f32 (f32 MXU accumulate).
    h = jnp.dot(state_ref[...], w1_ref[...], preferred_element_type=jnp.float32)
    h = jnp.maximum(h + b1_ref[...], 0.0)                          # [TB, H]

    # action_l into the 128-lane padded action dim (padded b2 lanes are -inf).
    logits = jnp.dot(h, w2_ref[...], preferred_element_type=jnp.float32)
    logits = logits + b2_ref[...]                                  # [TB, A_PAD]

    # Numerically stable softmax over dim=1.  exp(-inf - m) == 0, so the padded lanes
    # contribute nothing to the denominator.  Exact divide (cheap on a (TB,1) column).
    m = jnp.max(logits, axis=-1, keepdims=True)
    e = jnp.exp(logits - m)
    denom = jnp.sum(e, axis=-1, keepdims=True)
    probs = e / denom

    # Store only the real action columns -> narrow (TB, A) output, no padded HBM slab.
    out_ref[...] = probs[:, : out_ref.shape[-1]].astype(out_ref.dtype)


def _round_up(x, m):
    return ((x + m - 1) // m) * m


def prepare_params(w1, b1, w2, b2):
    """One-time weight prep, hoisted out of the per-call forward.

    Pads W2 columns with zeros and the extra b2 lanes with -inf so the padded logits
    vanish under exp() and the softmax denominator is unchanged.
    """
    H, A = w2.shape
    A_PAD = _round_up(max(A, 128), 128)
    w2p = jnp.zeros((H, A_PAD), jnp.float32).at[:, :A].set(w2.astype(jnp.float32))
    b2p = jnp.full((1, A_PAD), -jnp.inf, jnp.float32).at[:, :A].set(
        b2.astype(jnp.float32).reshape(1, A))
    return (w1.astype(jnp.float32),
            b1.astype(jnp.float32).reshape(1, -1),
            w2p, b2p)


@functools.partial(jax.jit, static_argnames=("action_size",))
def policy_forward(state, params, *, action_size):
    w1, b1, w2p, b2p = params
    B, S = state.shape
    H = w1.shape[1]
    A_PAD = w2p.shape[1]

    # Grid: 1 tile on single-TC parts (no pad, no row slice, one grid step); 2 equal
    # tiles when B splits cleanly so both v7x TensorCores get work via "parallel".
    if B % 16 == 0 and B >= 16:
        TB, B_PAD = B // 2, B
    else:
        B_PAD = _round_up(B, 8)
        TB = B_PAD
    if B_PAD != B:
        # Padded batch rows (state = 0) produce finite but meaningless softmax rows;
        # they are sliced off below and must never be consumed elsewhere.
        state = jnp.pad(state, ((0, B_PAD - B), (0, 0)))
    grid = (B_PAD // TB,)

    out = pl.pallas_call(
        policy_kernel,
        out_shape=jax.ShapeDtypeStruct((B_PAD, action_size), jnp.float32),
        grid=grid,
        in_specs=[
            pl.BlockSpec((TB, S), lambda i: (i, 0)),        # state: tiled over batch
            pl.BlockSpec((S, H), lambda i: (0, 0)),         # W1: VMEM-resident
            pl.BlockSpec((1, H), lambda i: (0, 0)),         # b1
            pl.BlockSpec((H, A_PAD), lambda i: (0, 0)),     # W2 (lane-padded)
            pl.BlockSpec((1, A_PAD), lambda i: (0, 0)),     # b2 (-inf padded lanes)
        ],
        out_specs=pl.BlockSpec((TB, action_size), lambda i: (i, 0)),
        compiler_params=pltpu.CompilerParams(
            dimension_semantics=("parallel",)),
    )(state, w1, b1, w2p, b2p)

    return out if B_PAD == B else out[:B]


def init_params(key, state_dim, hidden, action_size):
    # Deterministic PyTorch-Linear-style init: U(-1/sqrt(fan_in), 1/sqrt(fan_in)).
    k1, k2, k3, k4 = jax.random.split(key, 4)
    lim1 = 1.0 / jnp.sqrt(state_dim)
    lim2 = 1.0 / jnp.sqrt(hidden)
    w1 = jax.random.uniform(k1, (state_dim, hidden), jnp.float32, -lim1, lim1)
    b1 = jax.random.uniform(k2, (1, hidden), jnp.float32, -lim1, lim1)
    w2 = jax.random.uniform(k3, (hidden, action_size), jnp.float32, -lim2, lim2)
    b2 = jax.random.uniform(k4, (1, action_size), jnp.float32, -lim2, lim2)
    return w1, b1, w2, b2


def reference_forward(state, w1, b1, w2, b2):
    h = jnp.maximum(state @ w1 + b1, 0.0)
    logits = h @ w2 + b2
    return jax.nn.softmax(logits, axis=-1)


if __name__ == "__main__":
    # Small deterministic shapes: batch=64 (splits into 2x32 tiles -> exercises the
    # two-tile / megacore path), state_dim=32, hidden=32, action_size=4.
    B, STATE_DIM, HIDDEN, ACTION_SIZE = 64, 32, 32, 4

    key = jax.random.PRNGKey(0)
    k_state, k_params = jax.random.split(key)
    state = jax.random.normal(k_state, (B, STATE_DIM), jnp.float32)
    w1, b1, w2, b2 = init_params(k_params, STATE_DIM, HIDDEN, ACTION_SIZE)

    params = prepare_params(w1, b1, w2, b2)       # one-time, outside the forward
    out = policy_forward(state, params, action_size=ACTION_SIZE)
    out = jax.block_until_ready(out)

    ref = reference_forward(state, w1, b1, w2, b2)
    assert out.shape == (B, ACTION_SIZE)
    assert jnp.allclose(out, ref, atol=1e-5, rtol=1e-5)          # f32 end-to-end
    assert jnp.allclose(jnp.sum(out, axis=-1), 1.0, atol=1e-5)   # exact divide
    assert bool(jnp.all(out >= 0.0))

    # TODO(synk): 'continuous'/beta head (softplus(alpha)+1, softplus(beta)+1, concat)
    # not implemented since the default action_type is 'discrete'.
    print("KERNEL_OK")
</pallas_src>

<mosaic_0001>
module attributes {stable_mosaic.version = 11 : i64} {
  func.func @policy_kernel(%arg0: i32, %arg1: memref<32x32xf32, #tpu.memory_space<vmem>>, %arg2: memref<32x32xf32, #tpu.memory_space<vmem>>, %arg3: memref<1x32xf32, #tpu.memory_space<vmem>>, %arg4: memref<32x128xf32, #tpu.memory_space<vmem>>, %arg5: memref<1x128xf32, #tpu.memory_space<vmem>>, %arg6: memref<32x4xf32, #tpu.memory_space<vmem>>) attributes {dimension_semantics = [#tpu.dimension_semantics<parallel>], iteration_bounds = array<i64: 2>, scalar_prefetch = 0 : i64, scratch_operands = 0 : i64, tpu.core_type = #tpu.core_type<tc>, window_params = [{transform_indices = @transform_0, window_bounds = array<i64: 32, 32>}, {pipeline_mode = #tpu.pipeline_mode<synchronous>, transform_indices = @transform_1, window_bounds = array<i64: 32, 32>}, {pipeline_mode = #tpu.pipeline_mode<synchronous>, transform_indices = @transform_2, window_bounds = array<i64: 1, 32>}, {pipeline_mode = #tpu.pipeline_mode<synchronous>, transform_indices = @transform_3, window_bounds = array<i64: 32, 128>}, {pipeline_mode = #tpu.pipeline_mode<synchronous>, transform_indices = @transform_4, window_bounds = array<i64: 1, 128>}, {transform_indices = @transform_5, window_bounds = array<i64: 32, 4>}]} {
    %c0 = arith.constant 0 : index
    %c0_0 = arith.constant 0 : index
    %0 = vector.load %arg1[%c0, %c0_0] : memref<32x32xf32, #tpu.memory_space<vmem>>, vector<32x32xf32>
    %c0_1 = arith.constant 0 : index
    %c0_2 = arith.constant 0 : index
    %1 = vector.load %arg2[%c0_1, %c0_2] : memref<32x32xf32, #tpu.memory_space<vmem>>, vector<32x32xf32>
    %cst = arith.constant dense<0.000000e+00> : vector<32x32xf32>
    %2 = tpu.matmul %0, %1, %cst {dimension_numbers = #tpu.dot_dimension_numbers<[1], [0], [0], [1], [0, 0, 1, 1], [], []>} : vector<32x32xf32>, vector<32x32xf32>, vector<32x32xf32> -> vector<32x32xf32>
    %c0_3 = arith.constant 0 : index
    %c0_4 = arith.constant 0 : index
    %3 = vector.load %arg3[%c0_3, %c0_4] : memref<1x32xf32, #tpu.memory_space<vmem>>, vector<1x32xf32>
    %4 = vector.broadcast %3 : vector<1x32xf32> to vector<32x32xf32>
    %5 = arith.addf %2, %4 : vector<32x32xf32>
    %cst_5 = arith.constant 0.000000e+00 : f32
    %6 = vector.broadcast %cst_5 : f32 to vector<32x32xf32>
    %7 = arith.maximumf %5, %6 : vector<32x32xf32>
    %c0_6 = arith.constant 0 : index
    %c0_7 = arith.constant 0 : index
    %8 = vector.load %arg4[%c0_6, %c0_7] : memref<32x128xf32, #tpu.memory_space<vmem>>, vector<32x128xf32>
    %cst_8 = arith.constant dense<0.000000e+00> : vector<32x128xf32>
    %9 = tpu.matmul %7, %8, %cst_8 {dimension_numbers = #tpu.dot_dimension_numbers<[1], [0], [0], [1], [0, 0, 1, 1], [], []>} : vector<32x32xf32>, vector<32x128xf32>, vector<32x128xf32> -> vector<32x128xf32>
    %c0_9 = arith.constant 0 : index
    %c0_10 = arith.constant 0 : index
    %10 = vector.load %arg5[%c0_9, %c0_10] : memref<1x128xf32, #tpu.memory_space<vmem>>, vector<1x128xf32>
    %11 = vector.broadcast %10 : vector<1x128xf32> to vector<32x128xf32>
    %12 = arith.addf %9, %11 : vector<32x128xf32>
    %cst_11 = arith.constant dense<0xFF800000> : vector<32xf32>
    %13 = vector.multi_reduction <maximumf>, %12, %cst_11 [1] : vector<32x128xf32> to vector<32xf32>
    %14 = vector.shape_cast %13 : vector<32xf32> to vector<32x1xf32>
    %15 = vector.broadcast %14 : vector<32x1xf32> to vector<32x128xf32>
    %16 = arith.subf %12, %15 : vector<32x128xf32>
    %17 = math.exp %16 : vector<32x128xf32>
    %cst_12 = arith.constant dense<0.000000e+00> : vector<32xf32>
    %18 = vector.multi_reduction <add>, %17, %cst_12 [1] : vector<32x128xf32> to vector<32xf32>
    %19 = vector.shape_cast %18 : vector<32xf32> to vector<32x1xf32>
    %20 = vector.broadcast %19 : vector<32x1xf32> to vector<32x128xf32>
    %21 = arith.divf %17, %20 : vector<32x128xf32>
    %22 = vector.extract_strided_slice %21 {offsets = [0, 0], sizes = [32, 4], strides = [1, 1]} : vector<32x128xf32> to vector<32x4xf32>
    %c0_13 = arith.constant 0 : index
    %c0_14 = arith.constant 0 : index
    %23 = vector.load %arg6[%c0_13, %c0_14] : memref<32x4xf32, #tpu.memory_space<vmem>>, vector<32x4xf32>
    tpu.vector_store %arg6[%c0_13, %c0_14], %22 {strides = array<i32>} : memref<32x4xf32, #tpu.memory_space<vmem>>, vector<32x4xf32>,
    return
  }
  func.func @transform_0(%arg0: i32) -> (i32, i32) {
    %c0_i32 = arith.constant 0 : i32
    %c0_i32_0 = arith.constant 0 : i32
    return %arg0, %c0_i32 : i32, i32
  }
  func.func @transform_1(%arg0: i32) -> (i32, i32) {
    %c0_i32 = arith.constant 0 : i32
    %c0_i32_0 = arith.constant 0 : i32
    %c0_i32_1 = arith.constant 0 : i32
    return %c0_i32, %c0_i32_0 : i32, i32
  }
  func.func @transform_2(%arg0: i32) -> (i32, i32) {
    %c0_i32 = arith.constant 0 : i32
    %c0_i32_0 = arith.constant 0 : i32
    %c0_i32_1 = arith.constant 0 : i32
    return %c0_i32, %c0_i32_0 : i32, i32
  }
  func.func @transform_3(%arg0: i32) -> (i32, i32) {
    %c0_i32 = arith.constant 0 : i32
    %c0_i32_0 = arith.constant 0 : i32
    %c0_i32_1 = arith.constant 0 : i32
    return %c0_i32, %c0_i32_0 : i32, i32
  }
  func.func @transform_4(%arg0: i32) -> (i32, i32) {
    %c0_i32 = arith.constant 0 : i32
    %c0_i32_0 = arith.constant 0 : i32
    %c0_i32_1 = arith.constant 0 : i32
    return %c0_i32, %c0_i32_0 : i32, i32
  }
  func.func @transform_5(%arg0: i32) -> (i32, i32) {
    %c0_i32 = arith.constant 0 : i32
    %c0_i32_0 = arith.constant 0 : i32
    return %arg0, %c0_i32 : i32, i32
  }
}

</mosaic_0001>

<llo_original>
// kernel: policy_forward.1
$region0: #{policy_forward.1}
  #allocation0 [shape = 'u32[]', space=smem, size = 0x4, offset = 0x4, fixed_abs, tag = 'smem constant byte address 0x4 - core index']
  #allocation1 [shape = 'u32[144,128]{1,0:T(1,128)}', space=vmem, size = 0x12000, scoped, tag = 'internal scratch']
  %s0 = inlined_call_operand.vmem [shape: f32[64,32], index: 0, kind: input, shape index: {}]
  %s1 = inlined_call_operand.vmem [shape: f32[32,32], index: 1, kind: input, shape index: {}]
  %s2 = inlined_call_operand.vmem [shape: f32[1,32], index: 2, kind: input, shape index: {}]
  %s3 = inlined_call_operand.vmem [shape: f32[32,128], index: 3, kind: input, shape index: {}]
  %s4 = inlined_call_operand.vmem [shape: f32[1,128], index: 4, kind: input, shape index: {}]
  %s5 = inlined_call_operand.vmem [shape: f32[64,4], index: 5, kind: output, shape index: {}]
  %s6 = sld [smem:[#allocation0]]
  $region53: #{policy_forward.1} parent=0
    _
  %s8 = ssub.s32 1, %s6
  %s9 = scalar_select 0, %s8, %s6
  loop: start=0, step=1, limit=4
  $region2: #{policy_forward.1} parent=0 // loop_pre_header
    _
  $region3: #{policy_forward.1} parent=0 // loop_header
    %s11 = sphi 0, %s15
    %p12 = scmp.ge.s32.totalorder %s11, 4
    %s21 = sphi 0, %s23
    %s24 = sphi 0, %s21
    %s25 = sphi 0, %s24
    %s41 = sphi 0, %s25
    %s45 = sphi 0, %s45
    %s47 = sphi 0, %s45
    %s48 = sphi 0, %s47
    %s62 = sphi 0, %s48
    %s66 = sphi 0, %s66
    %s68 = sphi 0, %s66
    %s69 = sphi 0, %s68
    %s83 = sphi 0, %s69
    %s87 = sphi 0, %s87
    %s89 = sphi 0, %s87
    %s90 = sphi 0, %s89
    %s104 = sphi 0, %s90
    %s108 = sphi 0, %s108
    %s110 = sphi 0, %s108
    %s111 = sphi 0, %s110
    %s125 = sphi 0, %s111
    %s131 = sphi 0, %s133
    %s134 = sphi 0, %s131
    %s135 = sphi 0, %s134
    %s151 = sphi 0, %s135
  $region4: #{policy_forward.1} parent=0 // loop_header_branch
    %14 = sbr.rel (%p12) target = $region8
  $region5: #{policy_forward.1} parent=0 // loop_body
    %s16 = ssub.s32 %s11, 1
    %s17 = ssub.s32 %s11, 2
    %s18 = sadd.s32 %s11, 1
    %s19 = ssub.s32 %s11, %s18
    %p20 = scmp.eq.s32.totalorder %s19, 0
    %s22 = sadd.s32 %s21, 1
    %s23 = scalar_select %p20, %s21, %s22
    %p26 = pneg %p20
    %p27 = scmp.eq.s32.totalorder %s11, 1
    %p28 = por %p26, %p27
    %p29 = scmp.ne.s32.totalorder %s21, %s24
    %p30 = scmp.eq.s32.totalorder %s11, 0
    %p31 = por %p29, %p30
    %p32 = scmp.ne.s32.totalorder %s21, %s24
    %p33 = scmp.eq.s32.totalorder %s16, 1
    %p34 = por %p32, %p33
    %p35 = scmp.ne.s32.totalorder %s24, %s25
    %p36 = scmp.eq.s32.totalorder %s16, 0
    %p37 = por %p35, %p36
    %p38 = scmp.ne.s32.totalorder %s24, %s25
    %p39 = scmp.eq.s32.totalorder %s17, 1
    %p40 = por %p38, %p39
    %p42 = scmp.ne.s32.totalorder %s25, %s41
    %p43 = scmp.eq.s32.totalorder %s17, 0
    %p44 = por %p42, %p43
    %s46 = sadd.s32 %s45, 1
    %p49 = scmp.eq.s32.totalorder %s11, 1
    %p50 = scmp.ne.s32.totalorder %s45, %s47
    %p51 = scmp.eq.s32.totalorder %s11, 0
    %p52 = por %p50, %p51
    %p53 = scmp.ne.s32.totalorder %s45, %s47
    %p54 = scmp.eq.s32.totalorder %s16, 1
    %p55 = por %p53, %p54
    %p56 = scmp.ne.s32.totalorder %s47, %s48
    %p57 = scmp.eq.s32.totalorder %s16, 0
    %p58 = por %p56, %p57
    %p59 = scmp.ne.s32.totalorder %s47, %s48
    %p60 = scmp.eq.s32.totalorder %s17, 1
    %p61 = por %p59, %p60
    %p63 = scmp.ne.s32.totalorder %s48, %s62
    %p64 = scmp.eq.s32.totalorder %s17, 0
    %p65 = por %p63, %p64
    %s67 = sadd.s32 %s66, 1
    %p70 = scmp.eq.s32.totalorder %s11, 1
    %p71 = scmp.ne.s32.totalorder %s66, %s68
    %p72 = scmp.eq.s32.totalorder %s11, 0
    %p73 = por %p71, %p72
    %p74 = scmp.ne.s32.totalorder %s66, %s68
    %p75 = scmp.eq.s32.totalorder %s16, 1
    %p76 = por %p74, %p75
    %p77 = scmp.ne.s32.totalorder %s68, %s69
    %p78 = scmp.eq.s32.totalorder %s16, 0
    %p79 = por %p77, %p78
    %p80 = scmp.ne.s32.totalorder %s68, %s69
    %p81 = scmp.eq.s32.totalorder %s17, 1
    %p82 = por %p80, %p81
    %p84 = scmp.ne.s32.totalorder %s69, %s83
    %p85 = scmp.eq.s32.totalorder %s17, 0
    %p86 = por %p84, %p85
    %s88 = sadd.s32 %s87, 1
    %p91 = scmp.eq.s32.totalorder %s11, 1
    %p92 = scmp.ne.s32.totalorder %s87, %s89
    %p93 = scmp.eq.s32.totalorder %s11, 0
    %p94 = por %p92, %p93
    %p95 = scmp.ne.s32.totalorder %s87, %s89
    %p96 = scmp.eq.s32.totalorder %s16, 1
    %p97 = por %p95, %p96
    %p98 = scmp.ne.s32.totalorder %s89, %s90
    %p99 = scmp.eq.s32.totalorder %s16, 0
    %p100 = por %p98, %p99
    %p101 = scmp.ne.s32.totalorder %s89, %s90
    %p102 = scmp.eq.s32.totalorder %s17, 1
    %p103 = por %p101, %p102
    %p105 = scmp.ne.s32.totalorder %s90, %s104
    %p106 = scmp.eq.s32.totalorder %s17, 0
    %p107 = por %p105, %p106
    %s109 = sadd.s32 %s108, 1
    %p112 = scmp.eq.s32.totalorder %s11, 1
    %p113 = scmp.ne.s32.totalorder %s108, %s110
    %p114 = scmp.eq.s32.totalorder %s11, 0
    %p115 = por %p113, %p114
    %p116 = scmp.ne.s32.totalorder %s108, %s110
    %p117 = scmp.eq.s32.totalorder %s16, 1
    %p118 = por %p116, %p117
    %p119 = scmp.ne.s32.totalorder %s110, %s111
    %p120 = scmp.eq.s32.totalorder %s16, 0
    %p121 = por %p119, %p120
    %p122 = scmp.ne.s32.totalorder %s110, %s111
    %p123 = scmp.eq.s32.totalorder %s17, 1
    %p124 = por %p122, %p123
    %p126 = scmp.ne.s32.totalorder %s111, %s125
    %p127 = scmp.eq.s32.totalorder %s17, 0
    %p128 = por %p126, %p127
    %s129 = ssub.s32 %s11, %s18
    %p130 = scmp.eq.s32.totalorder %s129, 0
    %s132 = sadd.s32 %s131, 1
    %s133 = scalar_select %p130, %s131, %s132
    %p136 = pneg %p130
    %p137 = scmp.eq.s32.totalorder %s11, 1
    %p138 = por %p136, %p137
    %p139 = scmp.ne.s32.totalorder %s131, %s134
    %p140 = scmp.eq.s32.totalorder %s11, 0
    %p141 = por %p139, %p140
    %p142 = scmp.ne.s32.totalorder %s131, %s134
    %p143 = scmp.eq.s32.totalorder %s16, 1
    %p144 = por %p142, %p143
    %p145 = scmp.ne.s32.totalorder %s134, %s135
    %p146 = scmp.eq.s32.totalorder %s16, 0
    %p147 = por %p145, %p146
    %p148 = scmp.ne.s32.totalorder %s134, %s135
    %p149 = scmp.eq.s32.totalorder %s17, 1
    %p150 = por %p148, %p149
    %p152 = scmp.ne.s32.totalorder %s135, %s151
    %p153 = scmp.eq.s32.totalorder %s17, 0
    %p154 = por %p152, %p153
    %p155 = scmp.le.s32.totalorder 1, %s11
    %p156 = scmp.lt.s32.totalorder %s11, 3
    %p157 = pnand %p155, %p156
    %p158 = pneg %p157
    // Predicated region
    $region9: #{policy_forward.1} parent=5 // pred_check
      _
    $region10: #{policy_forward.1} parent=5 // pred_check_branch
      %160 = sbr.rel (%p157) target = $region12
    $region11: #{policy_forward.1} parent=5 // pred_region
      %s161 = ssub.s32 %s11, 1
      // Predicated region
      $region13: #{policy_forward.1} parent=11 // pred_check
        %p162 = pneg %p58
      $region14: #{policy_forward.1} parent=11 // pred_check_branch
        %164 = sbr.rel (%p162) target = $region16
      $region15: #{policy_forward.1} parent=11 // pred_region
        _
      $region16: #{policy_forward.1} parent=11 // pred_fallthru
        _
      // Predicated region
      $region17: #{policy_forward.1} parent=11 // pred_check
        %p165 = pneg %p79
      $region18: #{policy_forward.1} parent=11 // pred_check_branch
        %167 = sbr.rel (%p165) target = $region20
      $region19: #{policy_forward.1} parent=11 // pred_region
        _
      $region20: #{policy_forward.1} parent=11 // pred_fallthru
        _
      // Predicated region
      $region21: #{policy_forward.1} parent=11 // pred_check
        %p168 = pneg %p100
      $region22: #{policy_forward.1} parent=11 // pred_check_branch
        %170 = sbr.rel (%p168) target = $region24
      $region23: #{policy_forward.1} parent=11 // pred_region
        _
      $region24: #{policy_forward.1} parent=11 // pred_fallthru
        _
      // Predicated region
      $region25: #{policy_forward.1} parent=11 // pred_check
        %p171 = pneg %p121
      $region26: #{policy_forward.1} parent=11 // pred_check_branch
        %173 = sbr.rel (%p171) target = $region28
      $region27: #{policy_forward.1} parent=11 // pred_region
        _
      $region28: #{policy_forward.1} parent=11 // pred_fallthru
        _
    $region12: #{policy_forward.1} parent=5 // pred_fallthru
      _
    %p174 = scmp.lt.s32.totalorder %s11, 2
    // Predicated region
    $region29: #{policy_forward.1} parent=5 // pred_check
      %p175 = pneg %p174
    $region30: #{policy_forward.1} parent=5 // pred_check_branch
      %177 = sbr.rel (%p175) target = $region32
    $region31: #{policy_forward.1} parent=5 // pred_region
      // Predicated region
      $region33: #{policy_forward.1} parent=31 // pred_check
        %p178 = pneg %p31
      $region34: #{policy_forward.1} parent=31 // pred_check_branch
        %180 = sbr.rel (%p178) target = $region36
      $region35: #{policy_forward.1} parent=31 // pred_region
        %s181 = smul.u32 4, %s11
        %p182 = scmp.lt.s32.totalorder %s181, 7
        %s183 = scalar_select %p182, %s181, 7
        %s184 = smul.addr %s183, 8
        %s185 = scalar_lea.vmem %s0, %s184
        %s186 = smul.u32 4, %s11
      $region36: #{policy_forward.1} parent=31 // pred_fallthru
        _
    $region32: #{policy_forward.1} parent=5 // pred_fallthru
      _
    %p187 = scmp.le.s32.totalorder 1, %s11
    %p188 = scmp.lt.s32.totalorder %s11, 3
    %p189 = pnand %p187, %p188
    %p190 = pneg %p189
    // Predicated region
    $region37: #{policy_forward.1} parent=5 // pred_check
      _
    $region38: #{policy_forward.1} parent=5 // pred_check_branch
      %192 = sbr.rel (%p189) target = $region40
    $region39: #{policy_forward.1} parent=5 // pred_region
      %s193 = ssub.s32 %s11, 1
      %s194 = smul.u32 4, %s16
      %p195 = scmp.lt.s32.totalorder %s194, 7
      %s196 = scalar_select %p195, %s194, 7
      %s197 = smul.addr %s196, 8
      %s198 = scalar_lea.vmem %s0, %s197
      %p199 = pneg %p37
      %p200 = pneg %p34
      %p201 = pneg %p58
      %p202 = pneg %p55
      %p203 = pneg %p79
      %p204 = pneg %p76
      %p205 = pneg %p100
      %p206 = pneg %p97
      %p207 = pneg %p121
      %p208 = pneg %p118
      %p209 = pneg %p147
      %p210 = pneg %p144
      %s211 = smul.u32 4, %s16
      %p212 = scmp.lt.s32.totalorder %s211, 7
      %s213 = scalar_select %p212, %s211, 7
      %s214 = smul.addr %s213, 8
      %s215 = scalar_lea.vmem %s5, %s214
      %s216 = smul.u32 4, %s16
      %p217 = scmp.lt.s32.totalorder %s216, 7
      %s218 = scalar_select %p217, %s216, 7
      %s219 = smul.addr %s218, 8
      %s220 = scalar_lea.vmem %s0, %s219
      %s221 = smul.u32 4, %s16
      %s222 = smul.u32 4, %s16
      %p223 = scmp.lt.s32.totalorder %s222, 7
      %s224 = scalar_select %p223, %s222, 7
      %s225 = smul.addr %s224, 8
      %s226 = scalar_lea.vmem %s5, %s225
      %s227 = smul.u32 4, %s16
      %v228 = vld [vmem:[%s220] sm:$0xff]
      %v229 = vld [vmem:[%s220 + $0x8] sm:$0xff]
      %v230 = vld [vmem:[%s220 + $0x10] sm:$0xff]
      %v231 = vld [vmem:[%s220 + $0x18] sm:$0xff]
      %v232 = vld [vmem:[%s1] sm:$0xff]
      %v233 = vld [vmem:[%s1 + $0x8] sm:$0xff]
      %v234 = vld [vmem:[%s1 + $0x10] sm:$0xff]
      %v235 = vld [vmem:[%s1 + $0x18] sm:$0xff]
      %v236 = vld [vmem:[%s2] sm:$0x1]
      %v238 = vlaneseq
      %v239 = vshrl.u32 %v238, 7
      %v240 = vsub.s32 0, %v239
      %v241 = vrot.slane %v236, %v240
      %vm243 = vcmask 261120
      %v245 = vsel %vm243, %v228, 0
      %v248 = vsel %vm243, %v229, 0
      %v251 = vsel %vm243, %v230, 0
      %v254 = vsel %vm243, %v231, 0
      %256 = vmatprep.subr.mxu0 0.0
      %257 = vmatpush1.msra.mxu0 %v232
      %258 = vmatprep.subr.mxu0 0.0
      %259 = vmatpush1.msra.mxu0 %v233
      %260 = vmatprep.subr.mxu0 0.0
      %261 = vmatpush1.msra.mxu0 %v234
      %262 = vmatprep.subr.mxu0 0.0
      %263 = vmatpush1.msra.mxu0 %v235
      %264 = vmatprep.subr.mxu0 0.0
      %265 = vmatpush1.msra.mxu0 0.0
      %266 = vmatprep.subr.mxu0 0.0
      %267 = vmatpush1.msra.mxu0 0.0
      %268 = vmatprep.subr.mxu0 0.0
      %269 = vmatpush1.msra.mxu0 0.0
      %270 = vmatprep.subr.mxu0 0.0
      %271 = vmatpush1.msra.mxu0 0.0
      %272 = vmatprep.subr.mxu0 0.0
      %273 = vmatpush1.msra.mxu0 0.0
      %274 = vmatprep.subr.mxu0 0.0
      %275 = vmatpush1.msra.mxu0 0.0
      %276 = vmatprep.subr.mxu0 0.0
      %277 = vmatpush1.msra.mxu0 0.0
      %278 = vmatprep.subr.mxu0 0.0
      %279 = vmatpush1.msra.mxu0 0.0
      %280 = vmatprep.subr.mxu0 0.0
      %281 = vmatpush1.msra.mxu0 0.0
      %282 = vmatprep.subr.mxu0 0.0
      %283 = vmatpush1.msra.mxu0 0.0
      %284 = vmatprep.subr.mxu0 0.0
      %285 = vmatpush1.msra.mxu0 0.0
      %286 = vmatprep.subr.mxu0 0.0
      %287 = vmatpush1.msra.mxu0 0.0
      %288 = vmatprep.subr.mxu0 0.0
      %289 = vmatpush1.msra.mxu0 0.0
      %290 = vmatprep.subr.mxu0 0.0
      %291 = vmatpush1.msra.mxu0 0.0
      %292 = vmatprep.subr.mxu0 0.0
      %293 = vmatpush1.msra.mxu0 0.0
      %294 = vmatprep.subr.mxu0 0.0
      %295 = vmatpush1.msra.mxu0 0.0
      %296 = vmatprep.subr.mxu0 0.0
      %297 = vmatpush1.msra.mxu0 0.0
      %298 = vmatprep.subr.mxu0 0.0
      %299 = vmatpush1.msra.mxu0 0.0
      %300 = vmatprep.subr.mxu0 0.0
      %301 = vmatpush1.msra.mxu0 0.0
      %302 = vmatprep.subr.mxu0 0.0
      %303 = vmatpush1.msra.mxu0 0.0
      %304 = vmatprep.subr.mxu0 0.0
      %305 = vmatpush1.msra.mxu0 0.0
      %306 = vmatprep.subr.mxu0 0.0
      %307 = vmatpush1.msra.mxu0 0.0
      %308 = vmatprep.subr.mxu0 0.0
      %309 = vmatpush1.msra.mxu0 0.0
      %310 = vmatprep.subr.mxu0 0.0
      %311 = vmatpush1.msra.mxu0 0.0
      %312 = vmatprep.subr.mxu0 0.0
      %313 = vmatpush1.msra.mxu0 0.0
      %314 = vmatprep.subr.mxu0 0.0
      %315 = vmatpush1.msra.mxu0 0.0
      %316 = vmatprep.subr.mxu0 0.0
      %317 = vmatpush1.msra.mxu0 0.0
      %318 = vmatprep.subr.mxu0 0.0
      %319 = vmatpush1.msra.mxu0 0.0
      %320 = vmatprep.mubr.f32.mxu0 0.0
      %321 = vmatmul.mubr.f32.gmra.mrb[0].mxu0 %v245
      %v322 = vpop.f32.mrb[0].mxu0
      %v323 = vadd.f32 %v241, %v322
      %v324 = vpop.f32.mrb[0].mxu0
      %325 = vmatprep.mubr.f32.mxu0 0.0
      %326 = vmatmul.mubr.f32.gmra.mrb[0].mxu0 %v248
      %v327 = vpop.f32.mrb[0].mxu0
      %v328 = vadd.f32 %v241, %v327
      %v329 = vpop.f32.mrb[0].mxu0
      %330 = vmatprep.mubr.f32.mxu0 0.0
      %331 = vmatmul.mubr.f32.gmra.mrb[0].mxu0 %v251
      %v332 = vpop.f32.mrb[0].mxu0
      %v333 = vadd.f32 %v241, %v332
      %v334 = vpop.f32.mrb[0].mxu0
      %335 = vmatprep.mubr.f32.mxu0 0.0
      %336 = vmatmul.mubr.f32.gmra.mrb[0].mxu0 %v254
      %v337 = vpop.f32.mrb[0].mxu0
      %v338 = vadd.f32 %v241, %v337
      %v339 = vpop.f32.mrb[0].mxu0
      %340 = vdwg.mxu0
      %v341 = vmax.f32 %v323, 0.0
      %v342 = vmax.f32 %v328, 0.0
      %v343 = vmax.f32 %v333, 0.0
      %v344 = vmax.f32 %v338, 0.0
      %v345 = vld [vmem:[%s3] sm:$0xff]
      %v346 = vld [vmem:[%s3 + $0x8] sm:$0xff]
      %v347 = vld [vmem:[%s3 + $0x10] sm:$0xff]
      %v348 = vld [vmem:[%s3 + $0x18] sm:$0xff]
      %v349 = vld [vmem:[%s4] sm:$0x1]
      %v351 = vlaneseq
      %v352 = vshrl.u32 %v351, 7
      %v353 = vsub.s32 0, %v352
      %v354 = vrot.slane %v349, %v353
      %v357 = vsel %vm243, %v341, 0
      %v360 = vsel %vm243, %v342, 0
      %v363 = vsel %vm243, %v343, 0
      %v366 = vsel %vm243, %v344, 0
      %368 = vmatprep.subr.mxu0 0.0
      %369 = vmatpush1.msra.mxu0 %v345
      %370 = vmatprep.subr.mxu0 0.0
      %371 = vmatpush1.msra.mxu0 %v346
      %372 = vmatprep.subr.mxu0 0.0
      %373 = vmatpush1.msra.mxu0 %v347
      %374 = vmatprep.subr.mxu0 0.0
      %375 = vmatpush1.msra.mxu0 %v348
      %376 = vmatprep.subr.mxu0 0.0
      %377 = vmatpush1.msra.mxu0 0.0
      %378 = vmatprep.subr.mxu0 0.0
      %379 = vmatpush1.msra.mxu0 0.0
      %380 = vmatprep.subr.mxu0 0.0
      %381 = vmatpush1.msra.mxu0 0.0
      %382 = vmatprep.subr.mxu0 0.0
      %383 = vmatpush1.msra.mxu0 0.0
      %384 = vmatprep.subr.mxu0 0.0
      %385 = vmatpush1.msra.mxu0 0.0
      %386 = vmatprep.subr.mxu0 0.0
      %387 = vmatpush1.msra.mxu0 0.0
      %388 = vmatprep.subr.mxu0 0.0
      %389 = vmatpush1.msra.mxu0 0.0
      %390 = vmatprep.subr.mxu0 0.0
      %391 = vmatpush1.msra.mxu0 0.0
      %392 = vmatprep.subr.mxu0 0.0
      %393 = vmatpush1.msra.mxu0 0.0
      %394 = vmatprep.subr.mxu0 0.0
      %395 = vmatpush1.msra.mxu0 0.0
      %396 = vmatprep.subr.mxu0 0.0
      %397 = vmatpush1.msra.mxu0 0.0
      %398 = vmatprep.subr.mxu0 0.0
      %399 = vmatpush1.msra.mxu0 0.0
      %400 = vmatprep.subr.mxu0 0.0
      %401 = vmatpush1.msra.mxu0 0.0
      %402 = vmatprep.subr.mxu0 0.0
      %403 = vmatpush1.msra.mxu0 0.0
      %404 = vmatprep.subr.mxu0 0.0
      %405 = vmatpush1.msra.mxu0 0.0
      %406 = vmatprep.subr.mxu0 0.0
      %407 = vmatpush1.msra.mxu0 0.0
      %408 = vmatprep.subr.mxu0 0.0
      %409 = vmatpush1.msra.mxu0 0.0
      %410 = vmatprep.subr.mxu0 0.0
      %411 = vmatpush1.msra.mxu0 0.0
      %412 = vmatprep.subr.mxu0 0.0
      %413 = vmatpush1.msra.mxu0 0.0
      %414 = vmatprep.subr.mxu0 0.0
      %415 = vmatpush1.msra.mxu0 0.0
      %416 = vmatprep.subr.mxu0 0.0
      %417 = vmatpush1.msra.mxu0 0.0
      %418 = vmatprep.subr.mxu0 0.0
      %419 = vmatpush1.msra.mxu0 0.0
      %420 = vmatprep.subr.mxu0 0.0
      %421 = vmatpush1.msra.mxu0 0.0
      %422 = vmatprep.subr.mxu0 0.0
      %423 = vmatpush1.msra.mxu0 0.0
      %424 = vmatprep.subr.mxu0 0.0
      %425 = vmatpush1.msra.mxu0 0.0
      %426 = vmatprep.subr.mxu0 0.0
      %427 = vmatpush1.msra.mxu0 0.0
      %428 = vmatprep.subr.mxu0 0.0
      %429 = vmatpush1.msra.mxu0 0.0
      %430 = vmatprep.subr.mxu0 0.0
      %431 = vmatpush1.msra.mxu0 0.0
      %432 = vmatprep.mubr.f32.mxu0 0.0
      %433 = vmatmul.mubr.f32.gmra.mrb[0].mxu0 %v357
      %v434 = vpop.f32.mrb[0].mxu0
      %v435 = vadd.f32 %v354, %v434
      %v436 = vpop.f32.mrb[0].mxu0
      %437 = vmatprep.mubr.f32.mxu0 0.0
      %438 = vmatmul.mubr.f32.gmra.mrb[0].mxu0 %v360
      %v439 = vpop.f32.mrb[0].mxu0
      %v440 = vadd.f32 %v354, %v439
      %v441 = vpop.f32.mrb[0].mxu0
      %442 = vmatprep.mubr.f32.mxu0 0.0
      %443 = vmatmul.mubr.f32.gmra.mrb[0].mxu0 %v363
      %v444 = vpop.f32.mrb[0].mxu0
      %v445 = vadd.f32 %v354, %v444
      %v446 = vpop.f32.mrb[0].mxu0
      %447 = vmatprep.mubr.f32.mxu0 0.0
      %448 = vmatmul.mubr.f32.gmra.mrb[0].mxu0 %v366
      %v449 = vpop.f32.mrb[0].mxu0
      %v450 = vadd.f32 %v354, %v449
      %v451 = vpop.f32.mrb[0].mxu0
      %452 = vdwg.mxu0
      %453 = vmax.xlane.f32.xlu0 %v435
      %v454 = vpop.xlane.xlu0 %453
      %455 = vmax.xlane.f32.xlu0 %v440
      %v456 = vpop.xlane.xlu0 %455
      %457 = vmax.xlane.f32.xlu0 %v445
      %v458 = vpop.xlane.xlu0 %457
      %459 = vmax.xlane.f32.xlu0 %v450
      %v460 = vpop.xlane.xlu0 %459
      %v461 = vsub.f32 %v435, %v454
      %v462 = vsub.f32 %v440, %v456
      %v463 = vsub.f32 %v445, %v458
      %v464 = vsub.f32 %v450, %v460
      %v465 = vmul.f32 %v461, 1.442695
      %v466 = vpow.pop %v465
      %v467 = vmul.f32 %v462, 1.442695
      %v468 = vpow.pop %v467
      %v469 = vmul.f32 %v463, 1.442695
      %v470 = vpow.pop %v469
      %v471 = vmul.f32 %v464, 1.442695
      %v472 = vpow.pop %v471
      %473 = vadd.xlane.f32.xlu0 %v466
      %v474 = vpop.xlane.xlu0 %473
      %475 = vadd.xlane.f32.xlu0 %v468
      %v476 = vpop.xlane.xlu0 %475
      %477 = vadd.xlane.f32.xlu0 %v470
      %v478 = vpop.xlane.xlu0 %477
      %479 = vadd.xlane.f32.xlu0 %v472
      %v480 = vpop.xlane.xlu0 %479
      %v481 = vrcp.pop %v474
      %v482 = vmul.f32 %v466, %v481
      %v483 = vrcp.pop %v476
      %v484 = vmul.f32 %v468, %v483
      %v485 = vrcp.pop %v478
      %v486 = vmul.f32 %v470, %v485
      %v487 = vrcp.pop %v480
      %v488 = vmul.f32 %v472, %v487
      %vm489 = vcmask 31744
      %490 = vst.msk [vmem:[%s226] sm:$0xff] %vm489, %v482
      %491 = vst.msk [vmem:[%s226 + $0x8] sm:$0xff] %vm489, %v484
      %492 = vst.msk [vmem:[%s226 + $0x10] sm:$0xff] %vm489, %v486
      %493 = vst.msk [vmem:[%s226 + $0x18] sm:$0xff] %vm489, %v488
      %s494 = smul.u32 4, %s16
      %p495 = scmp.lt.s32.totalorder %s494, 7
      %s496 = scalar_select %p495, %s494, 7
      %s497 = smul.addr %s496, 8
      %s498 = scalar_lea.vmem %s5, %s497
      // Predicated region
      $region41: #{policy_forward.1} parent=39 // pred_check
        %p499 = pneg %p144
      $region42: #{policy_forward.1} parent=39 // pred_check_branch
        %501 = sbr.rel (%p499) target = $region44
      $region43: #{policy_forward.1} parent=39 // pred_region
        %s502 = smul.u32 4, %s16
      $region44: #{policy_forward.1} parent=39 // pred_fallthru
        _
    $region40: #{policy_forward.1} parent=5 // pred_fallthru
      _
    %p503 = scmp.le.s32.totalorder 2, %s11
    // Predicated region
    $region45: #{policy_forward.1} parent=5 // pred_check
      %p504 = pneg %p503
    $region46: #{policy_forward.1} parent=5 // pred_check_branch
      %506 = sbr.rel (%p504) target = $region48
    $region47: #{policy_forward.1} parent=5 // pred_region
      %s507 = ssub.s32 %s11, 2
      // Predicated region
      $region49: #{policy_forward.1} parent=47 // pred_check
        %p508 = pneg %p150
      $region50: #{policy_forward.1} parent=47 // pred_check_branch
        %510 = sbr.rel (%p508) target = $region52
      $region51: #{policy_forward.1} parent=47 // pred_region
        %s511 = smul.u32 4, %s17
        %p512 = scmp.lt.s32.totalorder %s511, 7
        %s513 = scalar_select %p512, %s511, 7
        %s514 = smul.addr %s513, 8
        %s515 = scalar_lea.vmem %s5, %s514
      $region52: #{policy_forward.1} parent=47 // pred_fallthru
        _
    $region48: #{policy_forward.1} parent=5 // pred_fallthru
      _
  $region6: #{policy_forward.1} parent=0 // loop_footer
    %s15 = sadd.s32 1, %s11
  $region7: #{policy_forward.1} parent=0 // loop_footer_branch
    %10 = sbr.rel target = $region3
  $region8: #{policy_forward.1} parent=0 // loop_exit
    _

</llo_original>
